<compile_context>
chip_gen: v6e
topology: v6e:2x2x1
jax: 0.10.0
libtpu: 0.0.40
codegen_flags: <defaults>
</compile_context>

<pallas_src>
import math

import jax
import jax.numpy as jnp
from jax.experimental import pallas as pl
from jax.experimental.pallas import tpu as pltpu


def _drop_path_kernel(scale_ref, x_ref, o_ref):
    # scale_ref: (bm, 1) float32 per-row scale (0.0 or 1/keep_prob)
    # x_ref/o_ref: (bm, L) tiles of the row-major (M, L) view of x.
    # The multiply promotes to f32 and casts back once, so bf16/fp16 inputs do
    # not lose precision on the 1/keep_prob factor.
    o_ref[...] = (x_ref[...] * scale_ref[...]).astype(o_ref.dtype)


def _choose_layout(batch, n_feat, itemsize, target_block_bytes=2 * 1024 * 1024):
    """Pick (rows_per_sample R, lane width L, rows_per_block bm)."""
    # Lane width: largest "nice" multiple of 128 dividing the per-sample
    # feature count; otherwise fall back to the full (un-tiled) feature dim
    # (a block dim equal to the full array dim is always legal).
    lane = None
    for cand in (4096, 2048, 1024, 512, 256, 128):
        if n_feat % cand == 0:
            lane = cand
            break
    if lane is None:
        lane = n_feat
    rows_per_sample = n_feat // lane
    total_rows = batch * rows_per_sample

    # Row-block height: multiple of 8 sublanes, ~target_block_bytes per block.
    rows_target = max(8, target_block_bytes // max(1, lane * itemsize))
    rows_target = (rows_target // 8) * 8
    block_rows = total_rows if rows_target >= total_rows else rows_target
    return rows_per_sample, lane, block_rows


def drop_path_pallas(x, drop_prob: float = 0.0, training: bool = False, *, key=None):
    """JAX/Pallas equivalent of the PyTorch drop_path forward."""
    if drop_prob == 0.0 or not training:
        return x
    if key is None:
        raise ValueError(
            "drop_path_pallas: training=True with drop_prob>0 requires a PRNG `key`.")

    keep_prob = 1.0 - drop_prob
    B = x.shape[0]
    N = math.prod(x.shape[1:])

    # Per-sample Bernoulli(keep_prob) mask, built exactly like the reference:
    # floor(keep_prob + U[0,1)) -> 1 with prob keep_prob, else 0.
    u = jax.random.uniform(key, (B,), dtype=jnp.float32)
    mask = jnp.floor(keep_prob + u)                        # 0.0 / 1.0, float32
    sample_scale = mask * jnp.float32(1.0 / keep_prob)     # exact scale in f32

    R, L, bm = _choose_layout(B, N, jnp.dtype(x.dtype).itemsize)
    M = B * R

    x2 = x.reshape(M, L)                                   # lane-dense 2-D view
    row_scale = jnp.repeat(sample_scale, R).reshape(M, 1)  # per-row scale

    out = pl.pallas_call(
        _drop_path_kernel,
        out_shape=jax.ShapeDtypeStruct((M, L), x.dtype),
        grid=(pl.cdiv(M, bm),),
        in_specs=[
            pl.BlockSpec((bm, 1), lambda i: (i, 0)),       # per-row scale
            pl.BlockSpec((bm, L), lambda i: (i, 0)),       # x rows
        ],
        out_specs=pl.BlockSpec((bm, L), lambda i: (i, 0)),
        compiler_params=pltpu.CompilerParams(
            dimension_semantics=("parallel",),
            vmem_limit_bytes=32 * 1024 * 1024,
        ),
    )(row_scale, x2)

    # TODO(synk): for very large activations / high drop_prob, a manual-DMA
    # variant (memory_space=pl.ANY + make_async_copy) could skip reading
    # dropped samples entirely and save ~drop_prob of the read bandwidth.
    return out.reshape(x.shape)


class DropPath:
    """Stateless JAX counterpart of the PyTorch DropPath module."""

    def __init__(self, drop_prob=None):
        self.drop_prob = 0.0 if drop_prob is None else float(drop_prob)

    def __call__(self, x, *, training=False, key=None):
        return drop_path_pallas(x, self.drop_prob, training, key=key)


if __name__ == "__main__":
    key = jax.random.PRNGKey(0)
    kx, kmask = jax.random.split(key)

    # Small NCHW input consistent with a vision-transformer residual branch.
    x = jax.random.normal(kx, (2, 4, 16, 16), dtype=jnp.float32)

    module = DropPath(drop_prob=0.5)

    # Training path (stochastic): exercised through the Pallas kernel.
    y_train = jax.block_until_ready(module(x, training=True, key=kmask))

    # Reference check against plain JAX using the same mask construction.
    keep_prob = 1.0 - module.drop_prob
    u = jax.random.uniform(kmask, (x.shape[0],), dtype=jnp.float32)
    mask = jnp.floor(keep_prob + u).reshape(-1, 1, 1, 1)
    y_ref = x / keep_prob * mask
    assert jnp.allclose(y_train, y_ref, atol=1e-6), "kernel mismatch vs reference"

    # Eval path: identity.
    y_eval = jax.block_until_ready(module(x, training=False))
    assert jnp.array_equal(y_eval, x)

    # bf16 path (halves bytes moved for this DMA-bound kernel); scale stays f32.
    xb = x.astype(jnp.bfloat16)
    yb = jax.block_until_ready(module(xb, training=True, key=kmask))
    yb_ref = (xb.astype(jnp.float32) * (mask / keep_prob)).astype(jnp.bfloat16)
    assert jnp.allclose(yb.astype(jnp.float32), yb_ref.astype(jnp.float32),
                        atol=1e-6, rtol=1e-2), "bf16 kernel mismatch vs reference"

    print("KERNEL_OK")
</pallas_src>

<mosaic_0001>
module attributes {stable_mosaic.version = 11 : i64} {
  func.func @_drop_path_kernel(%arg0: i32, %arg1: memref<2x1xf32, #tpu.memory_space<vmem>>, %arg2: memref<2x1024xf32, #tpu.memory_space<vmem>>, %arg3: memref<2x1024xf32, #tpu.memory_space<vmem>>) attributes {dimension_semantics = [#tpu.dimension_semantics<parallel>], iteration_bounds = array<i64: 1>, scalar_prefetch = 0 : i64, scratch_operands = 0 : i64, tpu.core_type = #tpu.core_type<tc>, window_params = [{transform_indices = @transform_0, window_bounds = array<i64: 2, 1>}, {transform_indices = @transform_1, window_bounds = array<i64: 2, 1024>}, {transform_indices = @transform_2, window_bounds = array<i64: 2, 1024>}]} {
    %c0 = arith.constant 0 : index
    %c0_0 = arith.constant 0 : index
    %0 = vector.load %arg2[%c0, %c0_0] : memref<2x1024xf32, #tpu.memory_space<vmem>>, vector<2x1024xf32>
    %c0_1 = arith.constant 0 : index
    %c0_2 = arith.constant 0 : index
    %1 = vector.load %arg1[%c0_1, %c0_2] : memref<2x1xf32, #tpu.memory_space<vmem>>, vector<2x1xf32>
    %2 = vector.broadcast %1 : vector<2x1xf32> to vector<2x1024xf32>
    %3 = arith.mulf %0, %2 : vector<2x1024xf32>
    %c0_3 = arith.constant 0 : index
    %c0_4 = arith.constant 0 : index
    %4 = vector.load %arg3[%c0_3, %c0_4] : memref<2x1024xf32, #tpu.memory_space<vmem>>, vector<2x1024xf32>
    tpu.vector_store %arg3[%c0_3, %c0_4], %3 {strides = array<i32>} : memref<2x1024xf32, #tpu.memory_space<vmem>>, vector<2x1024xf32>,
    return
  }
  func.func @transform_0(%arg0: i32) -> (i32, i32) {
    %c0_i32 = arith.constant 0 : i32
    %c0_i32_0 = arith.constant 0 : i32
    return %arg0, %c0_i32 : i32, i32
  }
  func.func @transform_1(%arg0: i32) -> (i32, i32) {
    %c0_i32 = arith.constant 0 : i32
    %c0_i32_0 = arith.constant 0 : i32
    return %arg0, %c0_i32 : i32, i32
  }
  func.func @transform_2(%arg0: i32) -> (i32, i32) {
    %c0_i32 = arith.constant 0 : i32
    %c0_i32_0 = arith.constant 0 : i32
    return %arg0, %c0_i32 : i32, i32
  }
}

</mosaic_0001>

<llo_original>
// kernel: tpu_custom_call.1
$region0: #{tpu_custom_call.1}
  #allocation0 [shape = 'u32[]', space=smem, size = 0x4, offset = 0x4, fixed_abs, tag = 'smem constant byte address 0x4 - core index']
  #allocation1 [shape = 'u32[144,128]{1,0:T(1,128)}', space=vmem, size = 0x12000, scoped, tag = 'internal scratch']
  %s0 = inlined_call_operand.vmem [shape: f32[2,1], index: 0, kind: input, shape index: {}]
  %s1 = inlined_call_operand.hbm [shape: f32[2,1024], index: 1, kind: input, shape index: {}]
  %s2 = inlined_call_operand.hbm [shape: f32[2,1024], index: 2, kind: output, shape index: {}]
  %s3 = sld [smem:[#allocation0]]
  $region22: #{tpu_custom_call.1} parent=0
    _
  %s5 = ssub.s32 1, %s3
  %s6 = scalar_select 0, %s5, %s3
  $region1: #{tpu_custom_call.1} parent=0
    #allocation2 [shape = 'u8[8192]{0}', space=vmem, size = 0x2000, scoped, tag = 'input window, operand 1, single buffered']
    #allocation3 [shape = 's32[1]{0}', space=sflag, size = 0x4, scoped, tag = 'scoped memory for tpu_custom_call.1']
    #allocation4 [shape = 's32[1]{0}', space=sflag, size = 0x4, scoped, tag = 'scoped memory for tpu_custom_call.1']
    #allocation5 [shape = 'u8[8192]{0}', space=vmem, size = 0x2000, scoped, tag = 'output window, operand 0, single buffered']
    %7 = vsyncpa [#allocation3], 0
    %8 = vsyncpa [#allocation4], 0
    // Predicated region
    $region2: #{tpu_custom_call.1} parent=1 // pred_check
      _
    $region3: #{tpu_custom_call.1} parent=1 // pred_check_branch
      %10 = sbr.rel (0) target = $region5
    $region4: #{tpu_custom_call.1} parent=1 // pred_region
      _
    $region5: #{tpu_custom_call.1} parent=1 // pred_fallthru
      _
    // Predicated region
    $region6: #{tpu_custom_call.1} parent=1 // pred_check
      _
    $region7: #{tpu_custom_call.1} parent=1 // pred_check_branch
      %12 = sbr.rel (0) target = $region9
    $region8: #{tpu_custom_call.1} parent=1 // pred_region
      %s14 = ssub.s32 256, 256
      %15 = vsyncadd [#allocation3], %s14
      %s17 = sshll.u32 [#allocation2], 4
      %s18 = int_to_ptr.vmem [resolvable:$true] %s17
      %20 = dma.hbm_to_vmem [thread:$0]  %s1, 256, %s18, [#allocation3]
    $region9: #{tpu_custom_call.1} parent=1 // pred_fallthru
      _
    // Predicated region
    $region10: #{tpu_custom_call.1} parent=1 // pred_check
      _
    $region11: #{tpu_custom_call.1} parent=1 // pred_check_branch
      %22 = sbr.rel (0) target = $region13
    $region12: #{tpu_custom_call.1} parent=1 // pred_region
      %23 = dma.done [#allocation3], 256
    $region13: #{tpu_custom_call.1} parent=1 // pred_fallthru
      _
    %v24 = vld [vmem:[#allocation2] sm:$0xff]
    %v25 = vld [vmem:[#allocation2 + $0x8] sm:$0xff]
    %v26 = vld [vmem:[%s0] sm:$0x3]
    %28 = vset.pattern.permute.xlu0 0
    %29 = vperm.xlu0 %28, %v26
    %v30 = vpop.permute.xlu0 %29
    %v32 = vunpack.c.l.s4 269488144
    %v33 = vunpack.c.0.s8 %v32
    %v34 = vlaneseq
    %v35 = vshrl.u32 %v34, 7
    %v36 = vsub.s32 %v33, %v35
    %v37 = vrot.slane %v30, %v36
    %v39 = vmul.f32 %v24, %v37
    %v40 = vmul.f32 %v25, %v37
    %41 = vst [vmem:[#allocation5] sm:$0xff] %v39
    %42 = vst [vmem:[#allocation5 + $0x8] sm:$0xff] %v40
    // Predicated region
    $region14: #{tpu_custom_call.1} parent=1 // pred_check
      _
    $region15: #{tpu_custom_call.1} parent=1 // pred_check_branch
      %44 = sbr.rel (0) target = $region17
    $region16: #{tpu_custom_call.1} parent=1 // pred_region
      %s46 = ssub.s32 256, 256
      %47 = vsyncadd [#allocation4], %s46
      %s49 = sshll.u32 [#allocation5], 4
      %s50 = int_to_ptr.vmem [resolvable:$true] %s49
      %52 = dma.vmem_to_hbm [thread:$0]  %s50, 256, %s2, [#allocation4]
    $region17: #{tpu_custom_call.1} parent=1 // pred_fallthru
      _
    // Predicated region
    $region18: #{tpu_custom_call.1} parent=1 // pred_check
      _
    $region19: #{tpu_custom_call.1} parent=1 // pred_check_branch
      %54 = sbr.rel (0) target = $region21
    $region20: #{tpu_custom_call.1} parent=1 // pred_region
      %55 = dma.done [#allocation4], 256
    $region21: #{tpu_custom_call.1} parent=1 // pred_fallthru
      _
    %56 = vsyncpa [#allocation3], 1
    %57 = vsyncpa [#allocation4], 1

</llo_original>
